<compile_context>
chip_gen: v7x
topology: tpu7x:2x2x1
jax: 0.10.0
libtpu: 0.0.40
codegen_flags: <defaults>
</compile_context>

<pallas_src>
import jax
import jax.numpy as jnp
from jax import lax
from jax.experimental import pallas as pl
from jax.experimental.pallas import tpu as pltpu

MULTI = 5    # MutanLayer(args.dim, 5)
TN = 4096    # entity tile width; sweep 2048-8192 at production NE (multiple of 128)


# ---------------- Pallas kernels ----------------

def mutan_fusion_kernel(e_ref, r_ref, w1_ref, b1_ref, w2_ref, b2_ref, o_ref):
    """fused = relu( sum_i relu(e@W1_i + b1_i) * relu(r@W2_i + b2_i) ).

    Branch weights are packed as one wide [D, 5*D] bf16 operand -> two MXU
    pushes instead of ten; bias/ReLU/product/branch-sum stay f32 on the VPU.
    Output is written in bf16 (it feeds the bf16 MXU score matmul).
    """
    e = e_ref[...].astype(jnp.bfloat16)                # [B, D]
    r = r_ref[...].astype(jnp.bfloat16)                # [B, D]
    x1 = jnp.dot(e, w1_ref[...], preferred_element_type=jnp.float32) + b1_ref[...]
    x2 = jnp.dot(r, w2_ref[...], preferred_element_type=jnp.float32) + b2_ref[...]
    p = jnp.maximum(x1, 0.0) * jnp.maximum(x2, 0.0)    # [B, 5*D] f32
    d = o_ref.shape[1]
    acc = p[:, 0:d]
    for i in range(1, MULTI):                          # static unroll, 128-aligned slices
        acc = acc + p[:, i * d:(i + 1) * d]
    o_ref[...] = jnp.maximum(acc, 0.0).astype(o_ref.dtype)   # final ReLU, bf16 store


def score_kernel(x_ref, ent_ref, o_ref):
    """pred_tile = sigmoid(fused @ ent_tile^T), emitted in bf16.

    ent_tile is a [tn, D] bf16 slab of the (zero-padded) entity table; the
    contraction is over the last dims so no transposed copy is ever built.
    """
    s = lax.dot_general(x_ref[...], ent_ref[...],
                        dimension_numbers=(((1,), (1,)), ((), ())),
                        preferred_element_type=jnp.float32)    # [B, tn] f32
    # sigmoid via EUP exp + EUP approx reciprocal (keeps the VALU slot free)
    p = pl.reciprocal(1.0 + jnp.exp(-s), approx=True)
    o_ref[...] = p.astype(o_ref.dtype)


# ---------------- wrappers ----------------

def mutan_fusion(e, r, w1w, b1w, w2w, b2w):
    B, D = e.shape
    vmem = lambda: pl.BlockSpec(memory_space=pltpu.MemorySpace.VMEM)
    return pl.pallas_call(
        mutan_fusion_kernel,
        out_shape=jax.ShapeDtypeStruct((B, D), jnp.bfloat16),
        in_specs=[vmem() for _ in range(6)],
        out_specs=vmem(),
    )(e, r, w1w, b1w, w2w, b2w)


def score(fused_bf16, ent_bf16, tn):
    """fused_bf16: [B, D].  ent_bf16: [NE_pad, D] with NE_pad % tn == 0."""
    B, D = fused_bf16.shape
    NE_pad = ent_bf16.shape[0]
    assert NE_pad % tn == 0  # guaranteed by prepare_params padding
    return pl.pallas_call(
        score_kernel,
        out_shape=jax.ShapeDtypeStruct((B, NE_pad), jnp.bfloat16),
        grid_spec=pltpu.PrefetchScalarGridSpec(
            num_scalar_prefetch=0,
            grid=(NE_pad // tn,),
            in_specs=[pl.BlockSpec((B, D), lambda j: (0, 0)),
                      # If profiling shows per-step DMA issue latency still
                      # exposed after the tn sweep, add
                      #   pipeline_mode=pl.Buffered(3)
                      # to this entity-tile spec (VMEM has >25 MB headroom).
                      pl.BlockSpec((tn, D), lambda j: (j, 0))],
            out_specs=pl.BlockSpec((B, tn), lambda j: (0, j)),
        ),
        compiler_params=pltpu.CompilerParams(
            dimension_semantics=("parallel",)),
    )(fused_bf16, ent_bf16)


def prepare_params(entity_emb, relation_emb, w1t, b1, w2t, b2, tn=TN):
    """One-time (hoisted) param prep: bf16 + zero-padded entity score table and
    wide-packed bf16 branch weights.  Done at setup, NOT per forward call.

    TODO(synk): for a further ~2x on the bandwidth-bound score kernel, store the
    entity table as fp8 (v7x) / int8 (v5e/v6e) with per-row scales and apply the
    scale as a post-dot per-column VPU multiply; needs accuracy validation.
    """
    NE, D = entity_emb.shape
    NE_128 = pl.cdiv(NE, 128) * 128
    tn = min(tn, NE_128)                       # don't over-pad tiny entity tables
    NE_pad = pl.cdiv(NE, tn) * tn
    ent_score_bf16 = jnp.pad(entity_emb, ((0, NE_pad - NE), (0, 0))).astype(jnp.bfloat16)
    # pack 5 branch Linear weights into one wide bf16 matmul operand [D, 5*D]
    w1w = jnp.transpose(w1t, (1, 0, 2)).reshape(D, MULTI * D).astype(jnp.bfloat16)
    w2w = jnp.transpose(w2t, (1, 0, 2)).reshape(D, MULTI * D).astype(jnp.bfloat16)
    b1w = b1.reshape(1, MULTI * D)             # f32 bias (added post-accumulate)
    b2w = b2.reshape(1, MULTI * D)
    return dict(entity_emb=entity_emb, relation_emb=relation_emb,
                ent_score_bf16=ent_score_bf16, num_entities=NE, tn=tn,
                w1w=w1w, b1w=b1w, w2w=w2w, b2w=b2w,
                w1t=w1t, b1=b1, w2t=w2t, b2=b2)


def mutan_forward(batch_inputs, params):
    # Embedding lookups (glue, plain JAX gather).
    head = batch_inputs[:, 0]
    rel = batch_inputs[:, 1]
    e_embed = params["entity_emb"][head]               # [B, D] f32
    r_embed = params["relation_emb"][rel]              # [B, D] f32
    fused = mutan_fusion(e_embed, r_embed,
                         params["w1w"], params["b1w"],
                         params["w2w"], params["b2w"])  # [B, D] bf16
    pred = score(fused, params["ent_score_bf16"], params["tn"])
    return pred[:, :params["num_entities"]]            # drop padded entity columns


# ---------------- pure-JAX reference ----------------

def mutan_reference(batch_inputs, params):
    head = batch_inputs[:, 0]
    rel = batch_inputs[:, 1]
    e = params["entity_emb"][head]
    r = params["relation_emb"][rel]
    acc = jnp.zeros_like(e)
    for i in range(MULTI):
        x1 = jax.nn.relu(e @ params["w1t"][i] + params["b1"][i])
        x2 = jax.nn.relu(r @ params["w2t"][i] + params["b2"][i])
        acc = acc + x1 * x2
    fused = jax.nn.relu(acc)
    return jax.nn.sigmoid(fused @ params["entity_emb"].T)


# ---------------- main ----------------

if __name__ == "__main__":
    B = 8            # batch
    D = 128          # args.dim == args.r_dim
    NE = 1000        # len(args.entity2id)  (non-multiple of 128 -> exercises padding)
    NR = 16          # len(args.relation2id) -> relation table has 2*NR rows

    key = jax.random.PRNGKey(0)
    k_ent, k_rel, k_w1, k_b1, k_w2, k_b2, k_idx_h, k_idx_r = jax.random.split(key, 8)

    # xavier_normal_ for embeddings
    ent_std = (2.0 / (NE + D)) ** 0.5
    rel_std = (2.0 / (2 * NR + D)) ** 0.5
    entity_emb = jax.random.normal(k_ent, (NE, D), jnp.float32) * ent_std
    relation_emb = jax.random.normal(k_rel, (2 * NR, D), jnp.float32) * rel_std

    # MutanLayer branch Linear(D, D) weights, stored pre-transposed [M, D_in, D_out];
    # biases as [M, 1, D].  (torch default init is kaiming-uniform; any deterministic
    # init is fine for this synthetic kernel test.)
    lin_std = (1.0 / D) ** 0.5
    w1t = jax.random.normal(k_w1, (MULTI, D, D), jnp.float32) * lin_std
    b1 = jax.random.normal(k_b1, (MULTI, 1, D), jnp.float32) * lin_std
    w2t = jax.random.normal(k_w2, (MULTI, D, D), jnp.float32) * lin_std
    b2 = jax.random.normal(k_b2, (MULTI, 1, D), jnp.float32) * lin_std

    params = prepare_params(entity_emb, relation_emb, w1t, b1, w2t, b2, tn=TN)

    head_idx = jax.random.randint(k_idx_h, (B,), 0, NE, jnp.int32)
    rel_idx = jax.random.randint(k_idx_r, (B,), 0, 2 * NR, jnp.int32)
    batch_inputs = jnp.stack([head_idx, rel_idx], axis=1)   # [B, 2]

    pred = mutan_forward(batch_inputs, params)
    pred = jax.block_until_ready(pred)

    ref = mutan_reference(batch_inputs, params)
    assert pred.shape == (B, NE)
    assert jnp.allclose(pred.astype(jnp.float32), ref, atol=1e-2, rtol=1e-2)

    print("KERNEL_OK")
</pallas_src>

<mosaic_0001>
module attributes {stable_mosaic.version = 11 : i64} {
  func.func @mutan_fusion_kernel(%arg0: memref<8x128xf32, #tpu.memory_space<vmem>>, %arg1: memref<8x128xf32, #tpu.memory_space<vmem>>, %arg2: memref<128x640xbf16, #tpu.memory_space<vmem>>, %arg3: memref<1x640xf32, #tpu.memory_space<vmem>>, %arg4: memref<128x640xbf16, #tpu.memory_space<vmem>>, %arg5: memref<1x640xf32, #tpu.memory_space<vmem>>, %arg6: memref<8x128xbf16, #tpu.memory_space<vmem>>) attributes {dimension_semantics = [], scalar_prefetch = 0 : i64, scratch_operands = 0 : i64, tpu.core_type = #tpu.core_type<tc>} {
    %c0 = arith.constant 0 : index
    %c0_0 = arith.constant 0 : index
    %0 = vector.load %arg0[%c0, %c0_0] : memref<8x128xf32, #tpu.memory_space<vmem>>, vector<8x128xf32>
    %1 = arith.truncf %0 : vector<8x128xf32> to vector<8x128xbf16>
    %c0_1 = arith.constant 0 : index
    %c0_2 = arith.constant 0 : index
    %2 = vector.load %arg1[%c0_1, %c0_2] : memref<8x128xf32, #tpu.memory_space<vmem>>, vector<8x128xf32>
    %3 = arith.truncf %2 : vector<8x128xf32> to vector<8x128xbf16>
    %c0_3 = arith.constant 0 : index
    %c0_4 = arith.constant 0 : index
    %4 = vector.load %arg2[%c0_3, %c0_4] : memref<128x640xbf16, #tpu.memory_space<vmem>>, vector<128x640xbf16>
    %cst = arith.constant dense<0.000000e+00> : vector<8x640xf32>
    %5 = tpu.matmul %1, %4, %cst {dimension_numbers = #tpu.dot_dimension_numbers<[1], [0], [0], [1], [0, 0, 1, 1], [], []>} : vector<8x128xbf16>, vector<128x640xbf16>, vector<8x640xf32> -> vector<8x640xf32>
    %c0_5 = arith.constant 0 : index
    %c0_6 = arith.constant 0 : index
    %6 = vector.load %arg3[%c0_5, %c0_6] : memref<1x640xf32, #tpu.memory_space<vmem>>, vector<1x640xf32>
    %7 = vector.broadcast %6 : vector<1x640xf32> to vector<8x640xf32>
    %8 = arith.addf %5, %7 : vector<8x640xf32>
    %c0_7 = arith.constant 0 : index
    %c0_8 = arith.constant 0 : index
    %9 = vector.load %arg4[%c0_7, %c0_8] : memref<128x640xbf16, #tpu.memory_space<vmem>>, vector<128x640xbf16>
    %cst_9 = arith.constant dense<0.000000e+00> : vector<8x640xf32>
    %10 = tpu.matmul %3, %9, %cst_9 {dimension_numbers = #tpu.dot_dimension_numbers<[1], [0], [0], [1], [0, 0, 1, 1], [], []>} : vector<8x128xbf16>, vector<128x640xbf16>, vector<8x640xf32> -> vector<8x640xf32>
    %c0_10 = arith.constant 0 : index
    %c0_11 = arith.constant 0 : index
    %11 = vector.load %arg5[%c0_10, %c0_11] : memref<1x640xf32, #tpu.memory_space<vmem>>, vector<1x640xf32>
    %12 = vector.broadcast %11 : vector<1x640xf32> to vector<8x640xf32>
    %13 = arith.addf %10, %12 : vector<8x640xf32>
    %cst_12 = arith.constant 0.000000e+00 : f32
    %14 = vector.broadcast %cst_12 : f32 to vector<8x640xf32>
    %15 = arith.maximumf %8, %14 : vector<8x640xf32>
    %cst_13 = arith.constant 0.000000e+00 : f32
    %16 = vector.broadcast %cst_13 : f32 to vector<8x640xf32>
    %17 = arith.maximumf %13, %16 : vector<8x640xf32>
    %18 = arith.mulf %15, %17 : vector<8x640xf32>
    %19 = vector.extract_strided_slice %18 {offsets = [0, 0], sizes = [8, 128], strides = [1, 1]} : vector<8x640xf32> to vector<8x128xf32>
    %20 = vector.extract_strided_slice %18 {offsets = [0, 128], sizes = [8, 128], strides = [1, 1]} : vector<8x640xf32> to vector<8x128xf32>
    %21 = arith.addf %19, %20 : vector<8x128xf32>
    %22 = vector.extract_strided_slice %18 {offsets = [0, 256], sizes = [8, 128], strides = [1, 1]} : vector<8x640xf32> to vector<8x128xf32>
    %23 = arith.addf %21, %22 : vector<8x128xf32>
    %24 = vector.extract_strided_slice %18 {offsets = [0, 384], sizes = [8, 128], strides = [1, 1]} : vector<8x640xf32> to vector<8x128xf32>
    %25 = arith.addf %23, %24 : vector<8x128xf32>
    %26 = vector.extract_strided_slice %18 {offsets = [0, 512], sizes = [8, 128], strides = [1, 1]} : vector<8x640xf32> to vector<8x128xf32>
    %27 = arith.addf %25, %26 : vector<8x128xf32>
    %cst_14 = arith.constant 0.000000e+00 : f32
    %28 = vector.broadcast %cst_14 : f32 to vector<8x128xf32>
    %29 = arith.maximumf %27, %28 : vector<8x128xf32>
    %30 = arith.truncf %29 : vector<8x128xf32> to vector<8x128xbf16>
    %c0_15 = arith.constant 0 : index
    %c0_16 = arith.constant 0 : index
    %31 = vector.load %arg6[%c0_15, %c0_16] : memref<8x128xbf16, #tpu.memory_space<vmem>>, vector<8x128xbf16>
    tpu.vector_store %arg6[%c0_15, %c0_16], %30 {strides = array<i32>} : memref<8x128xbf16, #tpu.memory_space<vmem>>, vector<8x128xbf16>,
    return
  }
}

</mosaic_0001>

<llo_original>
// kernel: tpu_custom_call.1
$region0: #{tpu_custom_call.1}
  #allocation0 [shape = 'u32[]', space=smem, size = 0x4, offset = 0x4, fixed_abs, tag = 'smem constant byte address 0x4 - core index']
  #allocation1 [shape = 'u32[144,128]{1,0:T(1,128)}', space=vmem, size = 0x12000, scoped, tag = 'internal scratch']
  %s0 = inlined_call_operand.hbm [shape: f32[8,128], index: 0, kind: input, shape index: {}]
  %s1 = inlined_call_operand.hbm [shape: f32[8,128], index: 1, kind: input, shape index: {}]
  %s2 = inlined_call_operand.hbm [shape: bf16[128,640], index: 2, kind: input, shape index: {}]
  %s3 = inlined_call_operand.vmem [shape: f32[1,640], index: 3, kind: input, shape index: {}]
  %s4 = inlined_call_operand.hbm [shape: bf16[128,640], index: 4, kind: input, shape index: {}]
  %s5 = inlined_call_operand.vmem [shape: f32[1,640], index: 5, kind: input, shape index: {}]
  %s6 = inlined_call_operand.hbm [shape: bf16[8,128], index: 6, kind: output, shape index: {}]
  %s7 = sld [smem:[#allocation0]]
  $region50: #{tpu_custom_call.1} parent=0
    _
  %s9 = ssub.s32 1, %s7
  %s10 = scalar_select 0, %s9, %s7
  $region1: #{tpu_custom_call.1} parent=0
    #allocation2 [shape = 'u8[4096]{0}', space=vmem, size = 0x1000, scoped, tag = 'input window, operand 0, single buffered']
    #allocation3 [shape = 's32[1]{0}', space=sflag, size = 0x4, scoped, tag = 'scoped memory for tpu_custom_call.1']
    #allocation4 [shape = 's32[1]{0}', space=sflag, size = 0x4, scoped, tag = 'scoped memory for tpu_custom_call.1']
    #allocation5 [shape = 'u8[4096]{0}', space=vmem, size = 0x1000, scoped, tag = 'input window, operand 1, single buffered']
    #allocation6 [shape = 's32[1]{0}', space=sflag, size = 0x4, scoped, tag = 'scoped memory for tpu_custom_call.1']
    #allocation7 [shape = 'u8[163840]{0}', space=vmem, size = 0x28000, scoped, tag = 'input window, operand 2, single buffered']
    #allocation8 [shape = 'u8[163840]{0}', space=vmem, size = 0x28000, scoped, tag = 'input window, operand 4, single buffered']
    #allocation9 [shape = 's32[1]{0}', space=sflag, size = 0x4, scoped, tag = 'scoped memory for tpu_custom_call.1']
    #allocation10 [shape = 'u8[2048]{0}', space=vmem, size = 0x800, scoped, tag = 'output window, operand 0, single buffered']
    %11 = vsyncpa [#allocation3], 0
    %12 = vsyncpa [#allocation6], 0
    %13 = vsyncpa [#allocation9], 0
    %14 = vsyncpa [#allocation4], 0
    // Predicated region
    $region2: #{tpu_custom_call.1} parent=1 // pred_check
      _
    $region3: #{tpu_custom_call.1} parent=1 // pred_check_branch
      %16 = sbr.rel (0) target = $region5
    $region4: #{tpu_custom_call.1} parent=1 // pred_region
      %s18 = ssub.s32 128, 128
      %19 = vsyncadd [#allocation3], %s18
      %s21 = sshll.u32 [#allocation2], 4
      %s22 = int_to_ptr.vmem [resolvable:$true] %s21
      %24 = dma.hbm_to_vmem [thread:$0]  %s0, 128, %s22, [#allocation3]
    $region5: #{tpu_custom_call.1} parent=1 // pred_fallthru
      _
    // Predicated region
    $region6: #{tpu_custom_call.1} parent=1 // pred_check
      _
    $region7: #{tpu_custom_call.1} parent=1 // pred_check_branch
      %26 = sbr.rel (0) target = $region9
    $region8: #{tpu_custom_call.1} parent=1 // pred_region
      %s28 = ssub.s32 128, 128
      %29 = vsyncadd [#allocation6], %s28
      %s31 = sshll.u32 [#allocation5], 4
      %s32 = int_to_ptr.vmem [resolvable:$true] %s31
      %34 = dma.hbm_to_vmem [thread:$0]  %s1, 128, %s32, [#allocation6]
    $region9: #{tpu_custom_call.1} parent=1 // pred_fallthru
      _
    // Predicated region
    $region10: #{tpu_custom_call.1} parent=1 // pred_check
      _
    $region11: #{tpu_custom_call.1} parent=1 // pred_check_branch
      %36 = sbr.rel (0) target = $region13
    $region12: #{tpu_custom_call.1} parent=1 // pred_region
      %s38 = ssub.s32 5120, 5120
      %39 = vsyncadd [#allocation6], %s38
      %s40 = sshll.u32 [#allocation7], 4
      %s41 = int_to_ptr.vmem [resolvable:$true] %s40
      %46 = dma.hbm_to_vmem [thread:$0]  %s2, 5120, %s41, [#allocation6], 320, 320, 20
    $region13: #{tpu_custom_call.1} parent=1 // pred_fallthru
      _
    // Predicated region
    $region14: #{tpu_custom_call.1} parent=1 // pred_check
      _
    $region15: #{tpu_custom_call.1} parent=1 // pred_check_branch
      %48 = sbr.rel (0) target = $region17
    $region16: #{tpu_custom_call.1} parent=1 // pred_region
      _
    $region17: #{tpu_custom_call.1} parent=1 // pred_fallthru
      _
    // Predicated region
    $region18: #{tpu_custom_call.1} parent=1 // pred_check
      _
    $region19: #{tpu_custom_call.1} parent=1 // pred_check_branch
      %50 = sbr.rel (0) target = $region21
    $region20: #{tpu_custom_call.1} parent=1 // pred_region
      %s52 = ssub.s32 5120, 5120
      %53 = vsyncadd [#allocation9], %s52
      %s54 = sshll.u32 [#allocation8], 4
      %s55 = int_to_ptr.vmem [resolvable:$true] %s54
      %60 = dma.hbm_to_vmem [thread:$0]  %s4, 5120, %s55, [#allocation9], 320, 320, 20
    $region21: #{tpu_custom_call.1} parent=1 // pred_fallthru
      _
    // Predicated region
    $region22: #{tpu_custom_call.1} parent=1 // pred_check
      _
    $region23: #{tpu_custom_call.1} parent=1 // pred_check_branch
      %62 = sbr.rel (0) target = $region25
    $region24: #{tpu_custom_call.1} parent=1 // pred_region
      _
    $region25: #{tpu_custom_call.1} parent=1 // pred_fallthru
      _
    // Predicated region
    $region26: #{tpu_custom_call.1} parent=1 // pred_check
      _
    $region27: #{tpu_custom_call.1} parent=1 // pred_check_branch
      %64 = sbr.rel (0) target = $region29
    $region28: #{tpu_custom_call.1} parent=1 // pred_region
      %65 = dma.done [#allocation3], 128
    $region29: #{tpu_custom_call.1} parent=1 // pred_fallthru
      _
    // Predicated region
    $region30: #{tpu_custom_call.1} parent=1 // pred_check
      _
    $region31: #{tpu_custom_call.1} parent=1 // pred_check_branch
      %67 = sbr.rel (0) target = $region33
    $region32: #{tpu_custom_call.1} parent=1 // pred_region
      %68 = dma.done [#allocation6], 128
    $region33: #{tpu_custom_call.1} parent=1 // pred_fallthru
      _
    // Predicated region
    $region34: #{tpu_custom_call.1} parent=1 // pred_check
      _
    $region35: #{tpu_custom_call.1} parent=1 // pred_check_branch
      %70 = sbr.rel (0) target = $region37
    $region36: #{tpu_custom_call.1} parent=1 // pred_region
      %71 = dma.done [#allocation6], 5120
    $region37: #{tpu_custom_call.1} parent=1 // pred_fallthru
      _
    // Predicated region
    $region38: #{tpu_custom_call.1} parent=1 // pred_check
      _
    $region39: #{tpu_custom_call.1} parent=1 // pred_check_branch
      %73 = sbr.rel (0) target = $region41
    $region40: #{tpu_custom_call.1} parent=1 // pred_region
      %74 = dma.done [#allocation9], 5120
    $region41: #{tpu_custom_call.1} parent=1 // pred_fallthru
      _
    %v76 = vld [vmem:[#allocation2] sm:$0xff]
    %v77 = vpack.c.bf16 %v76, %v76
    %v78 = vld [vmem:[#allocation5] sm:$0xff]
    %v79 = vpack.c.bf16 %v78, %v78
    %v80 = vld [vmem:[#allocation7] sm:$0xff]
    %v81 = vld [vmem:[#allocation7 + $0x8] sm:$0xff]
    %v82 = vld [vmem:[#allocation7 + $0x10] sm:$0xf]
    %v83 = vld [vmem:[#allocation7 + $0x14] sm:$0xff]
    %v84 = vld [vmem:[#allocation7 + $0x1c] sm:$0xff]
    %v85 = vld [vmem:[#allocation7 + $0x24] sm:$0xf]
    %v86 = vld [vmem:[#allocation7 + $0x28] sm:$0xff]
    %v87 = vld [vmem:[#allocation7 + $0x30] sm:$0xff]
    %v88 = vld [vmem:[#allocation7 + $0x38] sm:$0xf]
    %v89 = vld [vmem:[#allocation7 + $0x3c] sm:$0xff]
    %v90 = vld [vmem:[#allocation7 + $0x44] sm:$0xff]
    %v91 = vld [vmem:[#allocation7 + $0x4c] sm:$0xf]
    %v92 = vld [vmem:[#allocation7 + $0x50] sm:$0xff]
    %v93 = vld [vmem:[#allocation7 + $0x58] sm:$0xff]
    %v94 = vld [vmem:[#allocation7 + $0x60] sm:$0xf]
    %v95 = vld [vmem:[#allocation7 + $0x64] sm:$0xff]
    %v96 = vld [vmem:[#allocation7 + $0x6c] sm:$0xff]
    %v97 = vld [vmem:[#allocation7 + $0x74] sm:$0xf]
    %v98 = vld [vmem:[#allocation7 + $0x78] sm:$0xff]
    %v99 = vld [vmem:[#allocation7 + $0x80] sm:$0xff]
    %v100 = vld [vmem:[#allocation7 + $0x88] sm:$0xf]
    %v101 = vld [vmem:[#allocation7 + $0x8c] sm:$0xff]
    %v102 = vld [vmem:[#allocation7 + $0x94] sm:$0xff]
    %v103 = vld [vmem:[#allocation7 + $0x9c] sm:$0xf]
    %v104 = vld [vmem:[#allocation7 + $0xa0] sm:$0xff]
    %v105 = vld [vmem:[#allocation7 + $0xa8] sm:$0xff]
    %v106 = vld [vmem:[#allocation7 + $0xb0] sm:$0xf]
    %v107 = vld [vmem:[#allocation7 + $0xb4] sm:$0xff]
    %v108 = vld [vmem:[#allocation7 + $0xbc] sm:$0xff]
    %v109 = vld [vmem:[#allocation7 + $0xc4] sm:$0xf]
    %v110 = vld [vmem:[#allocation7 + $0xc8] sm:$0xff]
    %v111 = vld [vmem:[#allocation7 + $0xd0] sm:$0xff]
    %v112 = vld [vmem:[#allocation7 + $0xd8] sm:$0xf]
    %v113 = vld [vmem:[#allocation7 + $0xdc] sm:$0xff]
    %v114 = vld [vmem:[#allocation7 + $0xe4] sm:$0xff]
    %v115 = vld [vmem:[#allocation7 + $0xec] sm:$0xf]
    %v116 = vld [vmem:[#allocation7 + $0xf0] sm:$0xff]
    %v117 = vld [vmem:[#allocation7 + $0xf8] sm:$0xff]
    %v118 = vld [vmem:[#allocation7 + $0x100] sm:$0xf]
    %v119 = vld [vmem:[#allocation7 + $0x104] sm:$0xff]
    %v120 = vld [vmem:[#allocation7 + $0x10c] sm:$0xff]
    %v121 = vld [vmem:[#allocation7 + $0x114] sm:$0xf]
    %v122 = vld [vmem:[#allocation7 + $0x118] sm:$0xff]
    %v123 = vld [vmem:[#allocation7 + $0x120] sm:$0xff]
    %v124 = vld [vmem:[#allocation7 + $0x128] sm:$0xf]
    %v125 = vld [vmem:[#allocation7 + $0x12c] sm:$0xff]
    %v126 = vld [vmem:[#allocation7 + $0x134] sm:$0xff]
    %v127 = vld [vmem:[#allocation7 + $0x13c] sm:$0xf]
    %v128 = vld [vmem:[%s3] sm:$0x1f]
    %v130 = vlaneseq
    %v131 = vshrl.u32 %v130, 7
    %v132 = vsub.s32 0, %v131
    %v133 = vrot.slane %v128, %v132
    %v134 = vlaneseq
    %v135 = vshrl.u32 %v134, 7
    %v136 = vsub.s32 1, %v135
    %v137 = vrot.slane %v128, %v136
    %v138 = vlaneseq
    %v139 = vshrl.u32 %v138, 7
    %v140 = vsub.s32 2, %v139
    %v141 = vrot.slane %v128, %v140
    %v142 = vlaneseq
    %v143 = vshrl.u32 %v142, 7
    %v144 = vsub.s32 3, %v143
    %v145 = vrot.slane %v128, %v144
    %v146 = vlaneseq
    %v147 = vshrl.u32 %v146, 7
    %v148 = vsub.s32 4, %v147
    %v149 = vrot.slane %v128, %v148
    %v203 = vunpack.c.l.b16 %v80
    %v204 = vunpack.c.h.b16 %v80
    %v205 = vunpack.c.l.b16 %v81
    %v206 = vunpack.c.h.b16 %v81
    %v207 = vunpack.c.l.b16 %v82
    %v208 = vunpack.c.l.b16 %v83
    %v209 = vunpack.c.h.b16 %v83
    %v210 = vunpack.c.l.b16 %v84
    %v211 = vunpack.c.h.b16 %v84
    %v212 = vunpack.c.l.b16 %v85
    %v213 = vunpack.c.l.b16 %v86
    %v214 = vunpack.c.h.b16 %v86
    %v215 = vunpack.c.l.b16 %v87
    %v216 = vunpack.c.h.b16 %v87
    %v217 = vunpack.c.l.b16 %v88
    %v218 = vunpack.c.l.b16 %v89
    %v219 = vunpack.c.h.b16 %v89
    %v220 = vunpack.c.l.b16 %v90
    %v221 = vunpack.c.h.b16 %v90
    %v222 = vunpack.c.l.b16 %v91
    %v223 = vunpack.c.l.b16 %v92
    %v224 = vunpack.c.h.b16 %v92
    %v225 = vunpack.c.l.b16 %v93
    %v226 = vunpack.c.h.b16 %v93
    %v227 = vunpack.c.l.b16 %v94
    %v228 = vunpack.c.l.b16 %v95
    %v229 = vunpack.c.h.b16 %v95
    %v230 = vunpack.c.l.b16 %v96
    %v231 = vunpack.c.h.b16 %v96
    %v232 = vunpack.c.l.b16 %v97
    %v233 = vunpack.c.l.b16 %v98
    %v234 = vunpack.c.h.b16 %v98
    %v235 = vunpack.c.l.b16 %v99
    %v236 = vunpack.c.h.b16 %v99
    %v237 = vunpack.c.l.b16 %v100
    %v238 = vunpack.c.l.b16 %v101
    %v239 = vunpack.c.h.b16 %v101
    %v240 = vunpack.c.l.b16 %v102
    %v241 = vunpack.c.h.b16 %v102
    %v242 = vunpack.c.l.b16 %v103
    %v243 = vunpack.c.l.b16 %v104
    %v244 = vunpack.c.h.b16 %v104
    %v245 = vunpack.c.l.b16 %v105
    %v246 = vunpack.c.h.b16 %v105
    %v247 = vunpack.c.l.b16 %v106
    %v248 = vunpack.c.l.b16 %v107
    %v249 = vunpack.c.h.b16 %v107
    %v250 = vunpack.c.l.b16 %v108
    %v251 = vunpack.c.h.b16 %v108
    %v252 = vunpack.c.l.b16 %v109
    %v253 = vunpack.c.l.b16 %v110
    %v254 = vunpack.c.h.b16 %v110
    %v255 = vunpack.c.l.b16 %v111
    %v256 = vunpack.c.h.b16 %v111
    %v257 = vunpack.c.l.b16 %v112
    %v258 = vunpack.c.l.b16 %v113
    %v259 = vunpack.c.h.b16 %v113
    %v260 = vunpack.c.l.b16 %v114
    %v261 = vunpack.c.h.b16 %v114
    %v262 = vunpack.c.l.b16 %v115
    %v263 = vunpack.c.l.b16 %v116
    %v264 = vunpack.c.h.b16 %v116
    %v265 = vunpack.c.l.b16 %v117
    %v266 = vunpack.c.h.b16 %v117
    %v267 = vunpack.c.l.b16 %v118
    %v268 = vunpack.c.l.b16 %v119
    %v269 = vunpack.c.h.b16 %v119
    %v270 = vunpack.c.l.b16 %v120
    %v271 = vunpack.c.h.b16 %v120
    %v272 = vunpack.c.l.b16 %v121
    %v273 = vunpack.c.l.b16 %v122
    %v274 = vunpack.c.h.b16 %v122
    %v275 = vunpack.c.l.b16 %v123
    %v276 = vunpack.c.h.b16 %v123
    %v277 = vunpack.c.l.b16 %v124
    %v278 = vunpack.c.l.b16 %v125
    %v279 = vunpack.c.h.b16 %v125
    %v280 = vunpack.c.l.b16 %v126
    %v281 = vunpack.c.h.b16 %v126
    %v282 = vunpack.c.l.b16 %v127
    %v283 = vpack.c.b16 %v208, %v203
    %v284 = vpack.c.b16 %v209, %v204
    %v285 = vpack.c.b16 %v210, %v205
    %v286 = vpack.c.b16 %v211, %v206
    %v287 = vpack.c.b16 %v212, %v207
    %v288 = vpack.c.b16 %v218, %v213
    %v289 = vpack.c.b16 %v219, %v214
    %v290 = vpack.c.b16 %v220, %v215
    %v291 = vpack.c.b16 %v221, %v216
    %v292 = vpack.c.b16 %v222, %v217
    %v293 = vpack.c.b16 %v228, %v223
    %v294 = vpack.c.b16 %v229, %v224
    %v295 = vpack.c.b16 %v230, %v225
    %v296 = vpack.c.b16 %v231, %v226
    %v297 = vpack.c.b16 %v232, %v227
    %v298 = vpack.c.b16 %v238, %v233
    %v299 = vpack.c.b16 %v239, %v234
    %v300 = vpack.c.b16 %v240, %v235
    %v301 = vpack.c.b16 %v241, %v236
    %v302 = vpack.c.b16 %v242, %v237
    %v303 = vpack.c.b16 %v248, %v243
    %v304 = vpack.c.b16 %v249, %v244
    %v305 = vpack.c.b16 %v250, %v245
    %v306 = vpack.c.b16 %v251, %v246
    %v307 = vpack.c.b16 %v252, %v247
    %v308 = vpack.c.b16 %v258, %v253
    %v309 = vpack.c.b16 %v259, %v254
    %v310 = vpack.c.b16 %v260, %v255
    %v311 = vpack.c.b16 %v261, %v256
    %v312 = vpack.c.b16 %v262, %v257
    %v313 = vpack.c.b16 %v268, %v263
    %v314 = vpack.c.b16 %v269, %v264
    %v315 = vpack.c.b16 %v270, %v265
    %v316 = vpack.c.b16 %v271, %v266
    %v317 = vpack.c.b16 %v272, %v267
    %v318 = vpack.c.b16 %v278, %v273
    %v319 = vpack.c.b16 %v279, %v274
    %v320 = vpack.c.b16 %v280, %v275
    %v321 = vpack.c.b16 %v281, %v276
    %v322 = vpack.c.b16 %v282, %v277
    %363 = vmatprep.subr.bf16.mxu0 %v284
    %364 = vmatpush1.bf16.msra.mxu0 %v283
    %365 = vmatprep.subr.bf16.mxu0 %v289
    %366 = vmatpush1.bf16.msra.mxu0 %v288
    %367 = vmatprep.subr.bf16.mxu0 %v294
    %368 = vmatpush1.bf16.msra.mxu0 %v293
    %369 = vmatprep.subr.bf16.mxu0 %v299
    %370 = vmatpush1.bf16.msra.mxu0 %v298
    %371 = vmatprep.subr.bf16.mxu0 %v304
    %372 = vmatpush1.bf16.msra.mxu0 %v303
    %373 = vmatprep.subr.bf16.mxu0 %v309
    %374 = vmatpush1.bf16.msra.mxu0 %v308
    %375 = vmatprep.subr.bf16.mxu0 %v314
    %376 = vmatpush1.bf16.msra.mxu0 %v313
    %377 = vmatprep.subr.bf16.mxu0 %v319
    %378 = vmatpush1.bf16.msra.mxu0 %v318
    %379 = vmatprep.subr.bf16.mxu0 0
    %380 = vmatpush1.bf16.msra.mxu0 0
    %381 = vmatprep.subr.bf16.mxu0 0
    %382 = vmatpush1.bf16.msra.mxu0 0
    %383 = vmatprep.subr.bf16.mxu0 0
    %384 = vmatpush1.bf16.msra.mxu0 0
    %385 = vmatprep.subr.bf16.mxu0 0
    %386 = vmatpush1.bf16.msra.mxu0 0
    %387 = vmatprep.subr.bf16.mxu0 0
    %388 = vmatpush1.bf16.msra.mxu0 0
    %389 = vmatprep.subr.bf16.mxu0 0
    %390 = vmatpush1.bf16.msra.mxu0 0
    %391 = vmatprep.subr.bf16.mxu0 0
    %392 = vmatpush1.bf16.msra.mxu0 0
    %393 = vmatprep.subr.bf16.mxu0 0
    %394 = vmatpush1.bf16.msra.mxu0 0
    %395 = vmatprep.mubr.bf16.mxu0 0
    %396 = vmatmul.mubr.bf16.gmra.mrb[0].mxu0 %v77
    %v397 = vpop.f32.mrb[0].mxu0
    %v398 = vadd.f32 %v133, %v397
    %v399 = vpop.f32.mrb[0].mxu0
    %v400 = vadd.f32 %v137, %v399
    %v401 = vpop.f32.mrb[0].mxu0
    %v402 = vpop.f32.mrb[0].mxu0
    %403 = vdwg.mxu0
    %404 = vmatprep.subr.bf16.mxu0 %v286
    %405 = vmatpush1.bf16.msra.mxu0 %v285
    %406 = vmatprep.subr.bf16.mxu0 %v291
    %407 = vmatpush1.bf16.msra.mxu0 %v290
    %408 = vmatprep.subr.bf16.mxu0 %v296
    %409 = vmatpush1.bf16.msra.mxu0 %v295
    %410 = vmatprep.subr.bf16.mxu0 %v301
    %411 = vmatpush1.bf16.msra.mxu0 %v300
    %412 = vmatprep.subr.bf16.mxu0 %v306
    %413 = vmatpush1.bf16.msra.mxu0 %v305
    %414 = vmatprep.subr.bf16.mxu0 %v311
    %415 = vmatpush1.bf16.msra.mxu0 %v310
    %416 = vmatprep.subr.bf16.mxu0 %v316
    %417 = vmatpush1.bf16.msra.mxu0 %v315
    %418 = vmatprep.subr.bf16.mxu0 %v321
    %419 = vmatpush1.bf16.msra.mxu0 %v320
    %420 = vmatprep.subr.bf16.mxu0 0
    %421 = vmatpush1.bf16.msra.mxu0 0
    %422 = vmatprep.subr.bf16.mxu0 0
    %423 = vmatpush1.bf16.msra.mxu0 0
    %424 = vmatprep.subr.bf16.mxu0 0
    %425 = vmatpush1.bf16.msra.mxu0 0
    %426 = vmatprep.subr.bf16.mxu0 0
    %427 = vmatpush1.bf16.msra.mxu0 0
    %428 = vmatprep.subr.bf16.mxu0 0
    %429 = vmatpush1.bf16.msra.mxu0 0
    %430 = vmatprep.subr.bf16.mxu0 0
    %431 = vmatpush1.bf16.msra.mxu0 0
    %432 = vmatprep.subr.bf16.mxu0 0
    %433 = vmatpush1.bf16.msra.mxu0 0
    %434 = vmatprep.subr.bf16.mxu0 0
    %435 = vmatpush1.bf16.msra.mxu0 0
    %436 = vmatprep.mubr.bf16.mxu0 0
    %437 = vmatmul.mubr.bf16.gmra.mrb[0].mxu0 %v77
    %v438 = vpop.f32.mrb[0].mxu0
    %v439 = vadd.f32 %v141, %v438
    %v440 = vpop.f32.mrb[0].mxu0
    %v441 = vadd.f32 %v145, %v440
    %v442 = vpop.f32.mrb[0].mxu0
    %v443 = vpop.f32.mrb[0].mxu0
    %444 = vdwg.mxu0
    %445 = vmatprep.subr.bf16.mxu0 0
    %446 = vmatpush1.bf16.msra.mxu0 %v287
    %447 = vmatprep.subr.bf16.mxu0 0
    %448 = vmatpush1.bf16.msra.mxu0 %v292
    %449 = vmatprep.subr.bf16.mxu0 0
    %450 = vmatpush1.bf16.msra.mxu0 %v297
    %451 = vmatprep.subr.bf16.mxu0 0
    %452 = vmatpush1.bf16.msra.mxu0 %v302
    %453 = vmatprep.subr.bf16.mxu0 0
    %454 = vmatpush1.bf16.msra.mxu0 %v307
    %455 = vmatprep.subr.bf16.mxu0 0
    %456 = vmatpush1.bf16.msra.mxu0 %v312
    %457 = vmatprep.subr.bf16.mxu0 0
    %458 = vmatpush1.bf16.msra.mxu0 %v317
    %459 = vmatprep.subr.bf16.mxu0 0
    %460 = vmatpush1.bf16.msra.mxu0 %v322
    %461 = vmatprep.subr.bf16.mxu0 0
    %462 = vmatpush1.bf16.msra.mxu0 0
    %463 = vmatprep.subr.bf16.mxu0 0
    %464 = vmatpush1.bf16.msra.mxu0 0
    %465 = vmatprep.subr.bf16.mxu0 0
    %466 = vmatpush1.bf16.msra.mxu0 0
    %467 = vmatprep.subr.bf16.mxu0 0
    %468 = vmatpush1.bf16.msra.mxu0 0
    %469 = vmatprep.subr.bf16.mxu0 0
    %470 = vmatpush1.bf16.msra.mxu0 0
    %471 = vmatprep.subr.bf16.mxu0 0
    %472 = vmatpush1.bf16.msra.mxu0 0
    %473 = vmatprep.subr.bf16.mxu0 0
    %474 = vmatpush1.bf16.msra.mxu0 0
    %475 = vmatprep.subr.bf16.mxu0 0
    %476 = vmatpush1.bf16.msra.mxu0 0
    %477 = vmatprep.mubr.bf16.mxu0 0
    %478 = vmatmul.mubr.bf16.gmra.mrb[0].mxu0 %v77
    %v479 = vpop.f32.mrb[0].mxu0
    %v480 = vadd.f32 %v149, %v479
    %v481 = vpop.f32.mrb[0].mxu0
    %v482 = vpop.f32.mrb[0].mxu0
    %v483 = vpop.f32.mrb[0].mxu0
    %484 = vdwg.mxu0
    %v485 = vld [vmem:[#allocation8] sm:$0xff]
    %v486 = vld [vmem:[#allocation8 + $0x8] sm:$0xff]
    %v487 = vld [vmem:[#allocation8 + $0x10] sm:$0xf]
    %v488 = vld [vmem:[#allocation8 + $0x14] sm:$0xff]
    %v489 = vld [vmem:[#allocation8 + $0x1c] sm:$0xff]
    %v490 = vld [vmem:[#allocation8 + $0x24] sm:$0xf]
    %v491 = vld [vmem:[#allocation8 + $0x28] sm:$0xff]
    %v492 = vld [vmem:[#allocation8 + $0x30] sm:$0xff]
    %v493 = vld [vmem:[#allocation8 + $0x38] sm:$0xf]
    %v494 = vld [vmem:[#allocation8 + $0x3c] sm:$0xff]
    %v495 = vld [vmem:[#allocation8 + $0x44] sm:$0xff]
    %v496 = vld [vmem:[#allocation8 + $0x4c] sm:$0xf]
    %v497 = vld [vmem:[#allocation8 + $0x50] sm:$0xff]
    %v498 = vld [vmem:[#allocation8 + $0x58] sm:$0xff]
    %v499 = vld [vmem:[#allocation8 + $0x60] sm:$0xf]
    %v500 = vld [vmem:[#allocation8 + $0x64] sm:$0xff]
    %v501 = vld [vmem:[#allocation8 + $0x6c] sm:$0xff]
    %v502 = vld [vmem:[#allocation8 + $0x74] sm:$0xf]
    %v503 = vld [vmem:[#allocation8 + $0x78] sm:$0xff]
    %v504 = vld [vmem:[#allocation8 + $0x80] sm:$0xff]
    %v505 = vld [vmem:[#allocation8 + $0x88] sm:$0xf]
    %v506 = vld [vmem:[#allocation8 + $0x8c] sm:$0xff]
    %v507 = vld [vmem:[#allocation8 + $0x94] sm:$0xff]
    %v508 = vld [vmem:[#allocation8 + $0x9c] sm:$0xf]
    %v509 = vld [vmem:[#allocation8 + $0xa0] sm:$0xff]
    %v510 = vld [vmem:[#allocation8 + $0xa8] sm:$0xff]
    %v511 = vld [vmem:[#allocation8 + $0xb0] sm:$0xf]
    %v512 = vld [vmem:[#allocation8 + $0xb4] sm:$0xff]
    %v513 = vld [vmem:[#allocation8 + $0xbc] sm:$0xff]
    %v514 = vld [vmem:[#allocation8 + $0xc4] sm:$0xf]
    %v515 = vld [vmem:[#allocation8 + $0xc8] sm:$0xff]
    %v516 = vld [vmem:[#allocation8 + $0xd0] sm:$0xff]
    %v517 = vld [vmem:[#allocation8 + $0xd8] sm:$0xf]
    %v518 = vld [vmem:[#allocation8 + $0xdc] sm:$0xff]
    %v519 = vld [vmem:[#allocation8 + $0xe4] sm:$0xff]
    %v520 = vld [vmem:[#allocation8 + $0xec] sm:$0xf]
    %v521 = vld [vmem:[#allocation8 + $0xf0] sm:$0xff]
    %v522 = vld [vmem:[#allocation8 + $0xf8] sm:$0xff]
    %v523 = vld [vmem:[#allocation8 + $0x100] sm:$0xf]
    %v524 = vld [vmem:[#allocation8 + $0x104] sm:$0xff]
    %v525 = vld [vmem:[#allocation8 + $0x10c] sm:$0xff]
    %v526 = vld [vmem:[#allocation8 + $0x114] sm:$0xf]
    %v527 = vld [vmem:[#allocation8 + $0x118] sm:$0xff]
    %v528 = vld [vmem:[#allocation8 + $0x120] sm:$0xff]
    %v529 = vld [vmem:[#allocation8 + $0x128] sm:$0xf]
    %v530 = vld [vmem:[#allocation8 + $0x12c] sm:$0xff]
    %v531 = vld [vmem:[#allocation8 + $0x134] sm:$0xff]
    %v532 = vld [vmem:[#allocation8 + $0x13c] sm:$0xf]
    %v533 = vld [vmem:[%s5] sm:$0x1f]
    %v535 = vlaneseq
    %v536 = vshrl.u32 %v535, 7
    %v537 = vsub.s32 0, %v536
    %v538 = vrot.slane %v533, %v537
    %v539 = vlaneseq
    %v540 = vshrl.u32 %v539, 7
    %v541 = vsub.s32 1, %v540
    %v542 = vrot.slane %v533, %v541
    %v543 = vlaneseq
    %v544 = vshrl.u32 %v543, 7
    %v545 = vsub.s32 2, %v544
    %v546 = vrot.slane %v533, %v545
    %v547 = vlaneseq
    %v548 = vshrl.u32 %v547, 7
    %v549 = vsub.s32 3, %v548
    %v550 = vrot.slane %v533, %v549
    %v551 = vlaneseq
    %v552 = vshrl.u32 %v551, 7
    %v553 = vsub.s32 4, %v552
    %v554 = vrot.slane %v533, %v553
    %v608 = vunpack.c.l.b16 %v485
    %v609 = vunpack.c.h.b16 %v485
    %v610 = vunpack.c.l.b16 %v486
    %v611 = vunpack.c.h.b16 %v486
    %v612 = vunpack.c.l.b16 %v487
    %v613 = vunpack.c.l.b16 %v488
    %v614 = vunpack.c.h.b16 %v488
    %v615 = vunpack.c.l.b16 %v489
    %v616 = vunpack.c.h.b16 %v489
    %v617 = vunpack.c.l.b16 %v490
    %v618 = vunpack.c.l.b16 %v491
    %v619 = vunpack.c.h.b16 %v491
    %v620 = vunpack.c.l.b16 %v492
    %v621 = vunpack.c.h.b16 %v492
    %v622 = vunpack.c.l.b16 %v493
    %v623 = vunpack.c.l.b16 %v494
    %v624 = vunpack.c.h.b16 %v494
    %v625 = vunpack.c.l.b16 %v495
    %v626 = vunpack.c.h.b16 %v495
    %v627 = vunpack.c.l.b16 %v496
    %v628 = vunpack.c.l.b16 %v497
    %v629 = vunpack.c.h.b16 %v497
    %v630 = vunpack.c.l.b16 %v498
    %v631 = vunpack.c.h.b16 %v498
    %v632 = vunpack.c.l.b16 %v499
    %v633 = vunpack.c.l.b16 %v500
    %v634 = vunpack.c.h.b16 %v500
    %v635 = vunpack.c.l.b16 %v501
    %v636 = vunpack.c.h.b16 %v501
    %v637 = vunpack.c.l.b16 %v502
    %v638 = vunpack.c.l.b16 %v503
    %v639 = vunpack.c.h.b16 %v503
    %v640 = vunpack.c.l.b16 %v504
    %v641 = vunpack.c.h.b16 %v504
    %v642 = vunpack.c.l.b16 %v505
    %v643 = vunpack.c.l.b16 %v506
    %v644 = vunpack.c.h.b16 %v506
    %v645 = vunpack.c.l.b16 %v507
    %v646 = vunpack.c.h.b16 %v507
    %v647 = vunpack.c.l.b16 %v508
    %v648 = vunpack.c.l.b16 %v509
    %v649 = vunpack.c.h.b16 %v509
    %v650 = vunpack.c.l.b16 %v510
    %v651 = vunpack.c.h.b16 %v510
    %v652 = vunpack.c.l.b16 %v511
    %v653 = vunpack.c.l.b16 %v512
    %v654 = vunpack.c.h.b16 %v512
    %v655 = vunpack.c.l.b16 %v513
    %v656 = vunpack.c.h.b16 %v513
    %v657 = vunpack.c.l.b16 %v514
    %v658 = vunpack.c.l.b16 %v515
    %v659 = vunpack.c.h.b16 %v515
    %v660 = vunpack.c.l.b16 %v516
    %v661 = vunpack.c.h.b16 %v516
    %v662 = vunpack.c.l.b16 %v517
    %v663 = vunpack.c.l.b16 %v518
    %v664 = vunpack.c.h.b16 %v518
    %v665 = vunpack.c.l.b16 %v519
    %v666 = vunpack.c.h.b16 %v519
    %v667 = vunpack.c.l.b16 %v520
    %v668 = vunpack.c.l.b16 %v521
    %v669 = vunpack.c.h.b16 %v521
    %v670 = vunpack.c.l.b16 %v522
    %v671 = vunpack.c.h.b16 %v522
    %v672 = vunpack.c.l.b16 %v523
    %v673 = vunpack.c.l.b16 %v524
    %v674 = vunpack.c.h.b16 %v524
    %v675 = vunpack.c.l.b16 %v525
    %v676 = vunpack.c.h.b16 %v525
    %v677 = vunpack.c.l.b16 %v526
    %v678 = vunpack.c.l.b16 %v527
    %v679 = vunpack.c.h.b16 %v527
    %v680 = vunpack.c.l.b16 %v528
    %v681 = vunpack.c.h.b16 %v528
    %v682 = vunpack.c.l.b16 %v529
    %v683 = vunpack.c.l.b16 %v530
    %v684 = vunpack.c.h.b16 %v530
    %v685 = vunpack.c.l.b16 %v531
    %v686 = vunpack.c.h.b16 %v531
    %v687 = vunpack.c.l.b16 %v532
    %v688 = vpack.c.b16 %v613, %v608
    %v689 = vpack.c.b16 %v614, %v609
    %v690 = vpack.c.b16 %v615, %v610
    %v691 = vpack.c.b16 %v616, %v611
    %v692 = vpack.c.b16 %v617, %v612
    %v693 = vpack.c.b16 %v623, %v618
    %v694 = vpack.c.b16 %v624, %v619
    %v695 = vpack.c.b16 %v625, %v620
    %v696 = vpack.c.b16 %v626, %v621
    %v697 = vpack.c.b16 %v627, %v622
    %v698 = vpack.c.b16 %v633, %v628
    %v699 = vpack.c.b16 %v634, %v629
    %v700 = vpack.c.b16 %v635, %v630
    %v701 = vpack.c.b16 %v636, %v631
    %v702 = vpack.c.b16 %v637, %v632
    %v703 = vpack.c.b16 %v643, %v638
    %v704 = vpack.c.b16 %v644, %v639
    %v705 = vpack.c.b16 %v645, %v640
    %v706 = vpack.c.b16 %v646, %v641
    %v707 = vpack.c.b16 %v647, %v642
    %v708 = vpack.c.b16 %v653, %v648
    %v709 = vpack.c.b16 %v654, %v649
    %v710 = vpack.c.b16 %v655, %v650
    %v711 = vpack.c.b16 %v656, %v651
    %v712 = vpack.c.b16 %v657, %v652
    %v713 = vpack.c.b16 %v663, %v658
    %v714 = vpack.c.b16 %v664, %v659
    %v715 = vpack.c.b16 %v665, %v660
    %v716 = vpack.c.b16 %v666, %v661
    %v717 = vpack.c.b16 %v667, %v662
    %v718 = vpack.c.b16 %v673, %v668
    %v719 = vpack.c.b16 %v674, %v669
    %v720 = vpack.c.b16 %v675, %v670
    %v721 = vpack.c.b16 %v676, %v671
    %v722 = vpack.c.b16 %v677, %v672
    %v723 = vpack.c.b16 %v683, %v678
    %v724 = vpack.c.b16 %v684, %v679
    %v725 = vpack.c.b16 %v685, %v680
    %v726 = vpack.c.b16 %v686, %v681
    %v727 = vpack.c.b16 %v687, %v682
    %768 = vmatprep.subr.bf16.mxu0 %v689
    %769 = vmatpush1.bf16.msra.mxu0 %v688
    %770 = vmatprep.subr.bf16.mxu0 %v694
    %771 = vmatpush1.bf16.msra.mxu0 %v693
    %772 = vmatprep.subr.bf16.mxu0 %v699
    %773 = vmatpush1.bf16.msra.mxu0 %v698
    %774 = vmatprep.subr.bf16.mxu0 %v704
    %775 = vmatpush1.bf16.msra.mxu0 %v703
    %776 = vmatprep.subr.bf16.mxu0 %v709
    %777 = vmatpush1.bf16.msra.mxu0 %v708
    %778 = vmatprep.subr.bf16.mxu0 %v714
    %779 = vmatpush1.bf16.msra.mxu0 %v713
    %780 = vmatprep.subr.bf16.mxu0 %v719
    %781 = vmatpush1.bf16.msra.mxu0 %v718
    %782 = vmatprep.subr.bf16.mxu0 %v724
    %783 = vmatpush1.bf16.msra.mxu0 %v723
    %784 = vmatprep.subr.bf16.mxu0 0
    %785 = vmatpush1.bf16.msra.mxu0 0
    %786 = vmatprep.subr.bf16.mxu0 0
    %787 = vmatpush1.bf16.msra.mxu0 0
    %788 = vmatprep.subr.bf16.mxu0 0
    %789 = vmatpush1.bf16.msra.mxu0 0
    %790 = vmatprep.subr.bf16.mxu0 0
    %791 = vmatpush1.bf16.msra.mxu0 0
    %792 = vmatprep.subr.bf16.mxu0 0
    %793 = vmatpush1.bf16.msra.mxu0 0
    %794 = vmatprep.subr.bf16.mxu0 0
    %795 = vmatpush1.bf16.msra.mxu0 0
    %796 = vmatprep.subr.bf16.mxu0 0
    %797 = vmatpush1.bf16.msra.mxu0 0
    %798 = vmatprep.subr.bf16.mxu0 0
    %799 = vmatpush1.bf16.msra.mxu0 0
    %800 = vmatprep.mubr.bf16.mxu0 0
    %801 = vmatmul.mubr.bf16.gmra.mrb[0].mxu0 %v79
    %v802 = vpop.f32.mrb[0].mxu0
    %v803 = vadd.f32 %v538, %v802
    %v804 = vpop.f32.mrb[0].mxu0
    %v805 = vadd.f32 %v542, %v804
    %v806 = vpop.f32.mrb[0].mxu0
    %v807 = vpop.f32.mrb[0].mxu0
    %808 = vdwg.mxu0
    %809 = vmatprep.subr.bf16.mxu0 %v691
    %810 = vmatpush1.bf16.msra.mxu0 %v690
    %811 = vmatprep.subr.bf16.mxu0 %v696
    %812 = vmatpush1.bf16.msra.mxu0 %v695
    %813 = vmatprep.subr.bf16.mxu0 %v701
    %814 = vmatpush1.bf16.msra.mxu0 %v700
    %815 = vmatprep.subr.bf16.mxu0 %v706
    %816 = vmatpush1.bf16.msra.mxu0 %v705
    %817 = vmatprep.subr.bf16.mxu0 %v711
    %818 = vmatpush1.bf16.msra.mxu0 %v710
    %819 = vmatprep.subr.bf16.mxu0 %v716
    %820 = vmatpush1.bf16.msra.mxu0 %v715
    %821 = vmatprep.subr.bf16.mxu0 %v721
    %822 = vmatpush1.bf16.msra.mxu0 %v720
    %823 = vmatprep.subr.bf16.mxu0 %v726
    %824 = vmatpush1.bf16.msra.mxu0 %v725
    %825 = vmatprep.subr.bf16.mxu0 0
    %826 = vmatpush1.bf16.msra.mxu0 0
    %827 = vmatprep.subr.bf16.mxu0 0
    %828 = vmatpush1.bf16.msra.mxu0 0
    %829 = vmatprep.subr.bf16.mxu0 0
    %830 = vmatpush1.bf16.msra.mxu0 0
    %831 = vmatprep.subr.bf16.mxu0 0
    %832 = vmatpush1.bf16.msra.mxu0 0
    %833 = vmatprep.subr.bf16.mxu0 0
    %834 = vmatpush1.bf16.msra.mxu0 0
    %835 = vmatprep.subr.bf16.mxu0 0
    %836 = vmatpush1.bf16.msra.mxu0 0
    %837 = vmatprep.subr.bf16.mxu0 0
    %838 = vmatpush1.bf16.msra.mxu0 0
    %839 = vmatprep.subr.bf16.mxu0 0
    %840 = vmatpush1.bf16.msra.mxu0 0
    %841 = vmatprep.mubr.bf16.mxu0 0
    %842 = vmatmul.mubr.bf16.gmra.mrb[0].mxu0 %v79
    %v843 = vpop.f32.mrb[0].mxu0
    %v844 = vadd.f32 %v546, %v843
    %v845 = vpop.f32.mrb[0].mxu0
    %v846 = vadd.f32 %v550, %v845
    %v847 = vpop.f32.mrb[0].mxu0
    %v848 = vpop.f32.mrb[0].mxu0
    %849 = vdwg.mxu0
    %850 = vmatprep.subr.bf16.mxu0 0
    %851 = vmatpush1.bf16.msra.mxu0 %v692
    %852 = vmatprep.subr.bf16.mxu0 0
    %853 = vmatpush1.bf16.msra.mxu0 %v697
    %854 = vmatprep.subr.bf16.mxu0 0
    %855 = vmatpush1.bf16.msra.mxu0 %v702
    %856 = vmatprep.subr.bf16.mxu0 0
    %857 = vmatpush1.bf16.msra.mxu0 %v707
    %858 = vmatprep.subr.bf16.mxu0 0
    %859 = vmatpush1.bf16.msra.mxu0 %v712
    %860 = vmatprep.subr.bf16.mxu0 0
    %861 = vmatpush1.bf16.msra.mxu0 %v717
    %862 = vmatprep.subr.bf16.mxu0 0
    %863 = vmatpush1.bf16.msra.mxu0 %v722
    %864 = vmatprep.subr.bf16.mxu0 0
    %865 = vmatpush1.bf16.msra.mxu0 %v727
    %866 = vmatprep.subr.bf16.mxu0 0
    %867 = vmatpush1.bf16.msra.mxu0 0
    %868 = vmatprep.subr.bf16.mxu0 0
    %869 = vmatpush1.bf16.msra.mxu0 0
    %870 = vmatprep.subr.bf16.mxu0 0
    %871 = vmatpush1.bf16.msra.mxu0 0
    %872 = vmatprep.subr.bf16.mxu0 0
    %873 = vmatpush1.bf16.msra.mxu0 0
    %874 = vmatprep.subr.bf16.mxu0 0
    %875 = vmatpush1.bf16.msra.mxu0 0
    %876 = vmatprep.subr.bf16.mxu0 0
    %877 = vmatpush1.bf16.msra.mxu0 0
    %878 = vmatprep.subr.bf16.mxu0 0
    %879 = vmatpush1.bf16.msra.mxu0 0
    %880 = vmatprep.subr.bf16.mxu0 0
    %881 = vmatpush1.bf16.msra.mxu0 0
    %882 = vmatprep.mubr.bf16.mxu0 0
    %883 = vmatmul.mubr.bf16.gmra.mrb[0].mxu0 %v79
    %v884 = vpop.f32.mrb[0].mxu0
    %v885 = vadd.f32 %v554, %v884
    %v886 = vpop.f32.mrb[0].mxu0
    %v887 = vpop.f32.mrb[0].mxu0
    %v888 = vpop.f32.mrb[0].mxu0
    %889 = vdwg.mxu0
    %v890 = vmax.f32 %v398, 0.0
    %v891 = vmax.f32 %v400, 0.0
    %v892 = vmax.f32 %v439, 0.0
    %v893 = vmax.f32 %v441, 0.0
    %v894 = vmax.f32 %v480, 0.0
    %v895 = vmax.f32 %v803, 0.0
    %v896 = vmax.f32 %v805, 0.0
    %v897 = vmax.f32 %v844, 0.0
    %v898 = vmax.f32 %v846, 0.0
    %v899 = vmax.f32 %v885, 0.0
    %v900 = vmul.f32 %v890, %v895
    %v901 = vmul.f32 %v891, %v896
    %v902 = vmul.f32 %v892, %v897
    %v903 = vmul.f32 %v893, %v898
    %v904 = vmul.f32 %v894, %v899
    %v905 = vadd.f32 %v900, %v901
    %v906 = vadd.f32 %v905, %v902
    %v907 = vadd.f32 %v906, %v903
    %v908 = vadd.f32 %v907, %v904
    %v909 = vmax.f32 %v908, 0.0
    %v910 = vpack.c.bf16 %v909, %v909
    %911 = vst [vmem:[#allocation10] sm:$0xf] %v910
    // Predicated region
    $region42: #{tpu_custom_call.1} parent=1 // pred_check
      _
    $region43: #{tpu_custom_call.1} parent=1 // pred_check_branch
      %913 = sbr.rel (0) target = $region45
    $region44: #{tpu_custom_call.1} parent=1 // pred_region
      %s915 = ssub.s32 64, 64
      %916 = vsyncadd [#allocation4], %s915
      %s918 = sshll.u32 [#allocation10], 4
      %s919 = int_to_ptr.vmem [resolvable:$true] %s918
      %921 = dma.vmem_to_hbm [thread:$0]  %s919, 64, %s6, [#allocation4]
    $region45: #{tpu_custom_call.1} parent=1 // pred_fallthru
      _
    // Predicated region
    $region46: #{tpu_custom_call.1} parent=1 // pred_check
      _
    $region47: #{tpu_custom_call.1} parent=1 // pred_check_branch
      %923 = sbr.rel (0) target = $region49
    $region48: #{tpu_custom_call.1} parent=1 // pred_region
      %924 = dma.done [#allocation4], 64
    $region49: #{tpu_custom_call.1} parent=1 // pred_fallthru
      _
    %925 = vsyncpa [#allocation3], 1
    %926 = vsyncpa [#allocation6], 1
    %927 = vsyncpa [#allocation9], 1
    %928 = vsyncpa [#allocation4], 1

</llo_original>
